<compile_context>
chip_gen: v7x
topology: tpu7x:2x2x1
jax: 0.10.0
libtpu: 0.0.40
codegen_flags: <defaults>
</compile_context>

<pallas_src>
import functools
import math

import jax
import jax.numpy as jnp
from jax.experimental import pallas as pl
from jax.experimental.pallas import tpu as pltpu


def make_positional_encoding(d_model: int, max_len: int = 10000,
                             dtype=jnp.float32) -> jnp.ndarray:
    """Sinusoidal table matching the PyTorch __init__, precomputed in `dtype`.

    Returns pe of shape (max_len, d_model).
    """
    assert d_model % 2 == 0, "d_model must be even (same limitation as the PyTorch module)"
    position = jnp.arange(0, max_len, dtype=jnp.float32)[:, None]            # (L, 1)
    div_term = jnp.exp(
        jnp.arange(0, d_model, 2, dtype=jnp.float32) * (-math.log(10000.0) / d_model)
    )                                                                         # (D/2,)
    angles = position * div_term                                              # (L, D/2)
    pe = jnp.zeros((max_len, d_model), dtype=jnp.float32)
    pe = pe.at[:, 0::2].set(jnp.sin(angles))
    pe = pe.at[:, 1::2].set(jnp.cos(angles))
    return pe.astype(dtype)


# ----------------------------------------------------------------------------
# Chip-specific tuning knobs (conservative fallback when the chip is unknown).
# ----------------------------------------------------------------------------
def _chip_params():
    try:
        kind = jax.devices()[0].device_kind.lower()
    except Exception:
        kind = ""
    if "v7" in kind:
        # 32 MiB scoped default, 64 MiB physical per TC; 2 TCs per chip.
        return {"budget": 16 << 20, "vmem_limit": 24 << 20, "two_cores": True}
    if "v6" in kind:
        # 32 MiB scoped default, 128 MiB physical.
        return {"budget": 24 << 20, "vmem_limit": 32 << 20, "two_cores": False}
    if "v5" in kind:
        # 16 MiB scoped default is the binding limit on v5e.
        return {"budget": 12 << 20, "vmem_limit": None, "two_cores": False}
    return {"budget": 12 << 20, "vmem_limit": None, "two_cores": False}


def _divisors_desc(n: int):
    divs = set()
    i = 1
    while i * i <= n:
        if n % i == 0:
            divs.add(i)
            divs.add(n // i)
        i += 1
    return sorted(divs, reverse=True)


def _choose_tiles(S: int, B: int, D: int, itemsize: int, budget_bytes: int,
                  target_x_block_bytes: int = 4 << 20,
                  prefer_two_seq_tiles: bool = False):
    """Pick (seq_tile, batch_tile, lane_aligned) under a VMEM byte budget.

    Per grid step the pipeline double-buffers the x block, out block and pe
    block; the jnp.tile fallback path additionally needs a (ts, bt*D) temp.
    """
    sublane = max(8, 32 // max(1, itemsize))        # 8 f32, 16 bf16, 32 int8/fp8
    lane_aligned = (D % 128 == 0)

    def step_bytes(ts, bt):
        b = 2 * (2 * ts * bt * D + ts * D) * itemsize
        if bt > 1 and not lane_aligned:
            b += ts * bt * D * itemsize             # jnp.tile temporary
        return b

    # Batch (lane) tile: full batch unless even a minimal-row block would blow
    # the budget; lane tiling requires D % 128 == 0 to keep blocks lane-legal.
    bt = B
    if lane_aligned:
        for cand in _divisors_desc(B):
            if step_bytes(sublane, cand) <= budget_bytes or cand == 1:
                bt = cand
                break

    # Rows per tile: byte-driven target (~4 MiB x block), clamped by the budget.
    rows_target = max(sublane, target_x_block_bytes // max(1, bt * D * itemsize))
    rows_cap = max(sublane, budget_bytes // max(1, step_bytes(1, bt)))
    ts = min(rows_target, rows_cap)
    ts = max(sublane, (ts // sublane) * sublane)

    if prefer_two_seq_tiles and S > sublane:
        # v7x: make sure both TensorCores get at least one seq tile.
        half = -(-S // 2)
        half = -(-half // sublane) * sublane
        ts = min(ts, half)

    if ts >= S:
        ts = S                                       # full-dim block is always legal
    return ts, bt, lane_aligned


# ----------------------------------------------------------------------------
# Kernel
# ----------------------------------------------------------------------------
def _pe_add_kernel(x_ref, pe_ref, o_ref, *, batch_tile: int, d_model: int,
                   lane_aligned: bool):
    # x_ref / o_ref: (ts, bt*D) lane-dense tile; pe_ref: (ts, D) seq tile.
    pe_tile = pe_ref[...]
    if batch_tile == 1:
        o_ref[...] = x_ref[...] + pe_tile
    elif lane_aligned:
        # Static loop of lane-aligned sliced adds: no (ts, bt*D) temporary,
        # each store is an unmasked full-width vst.
        for b in range(batch_tile):
            sl = slice(b * d_model, (b + 1) * d_model)
            o_ref[:, sl] = x_ref[:, sl] + pe_tile
    else:
        # Fallback for D not a multiple of 128 (rare): replicate in VMEM.
        o_ref[...] = x_ref[...] + jnp.tile(pe_tile, (1, batch_tile))


def positional_encoding_forward(x: jnp.ndarray, pe: jnp.ndarray) -> jnp.ndarray:
    """x: (S, B, D);  pe: (max_len, D).  Returns x + pe[:S] broadcast over batch."""
    S, B, D = x.shape
    chip = _chip_params()

    pe_slice = pe[:S, :]
    if pe_slice.dtype != x.dtype:
        # Avoided when pe was precomputed in the activation dtype at init.
        pe_slice = pe_slice.astype(x.dtype)

    # Free reshape: merge (B, D) into one lane-dense trailing dim.
    x2 = x.reshape(S, B * D)

    ts, bt, lane_aligned = _choose_tiles(
        S, B, D, x.dtype.itemsize, chip["budget"],
        prefer_two_seq_tiles=chip["two_cores"],
    )
    nsq = pl.cdiv(S, ts)
    nb = pl.cdiv(B, bt)

    kernel = functools.partial(_pe_add_kernel, batch_tile=bt, d_model=D,
                               lane_aligned=lane_aligned)

    # Seq axis: CORE_PARALLEL on v7x (2 TCs) when there are >= 2 seq tiles.
    core_parallel = getattr(pltpu, "CORE_PARALLEL", None)
    seq_sem = (core_parallel
               if (chip["two_cores"] and nsq >= 2 and core_parallel is not None)
               else "parallel")

    if nb == 1:
        grid = (nsq,)
        x_spec = pl.BlockSpec((ts, bt * D), lambda i: (i, 0))
        pe_spec = pl.BlockSpec((ts, D), lambda i: (i, 0))
        out_spec = pl.BlockSpec((ts, bt * D), lambda i: (i, 0))
        sem = (seq_sem,)
    else:
        # Lane-tile huge B*D so blocks stay inside the VMEM budget; pe is still
        # fetched once per seq tile (same block index across the batch axis).
        grid = (nsq, nb)
        x_spec = pl.BlockSpec((ts, bt * D), lambda i, j: (i, j))
        pe_spec = pl.BlockSpec((ts, D), lambda i, j: (i, 0))
        out_spec = pl.BlockSpec((ts, bt * D), lambda i, j: (i, j))
        sem = (seq_sem, "arbitrary")

    cp_kwargs = {"dimension_semantics": sem}
    if chip["vmem_limit"] is not None:
        cp_kwargs["vmem_limit_bytes"] = int(chip["vmem_limit"])

    out2 = pl.pallas_call(
        kernel,
        out_shape=jax.ShapeDtypeStruct((S, B * D), x.dtype),
        grid_spec=pltpu.PrefetchScalarGridSpec(
            num_scalar_prefetch=0,
            grid=grid,
            in_specs=[x_spec, pe_spec],
            out_specs=out_spec,
        ),
        compiler_params=pltpu.CompilerParams(**cp_kwargs),
    )(x2, pe_slice)

    return out2.reshape(S, B, D)


if __name__ == "__main__":
    d_model = 128
    seq_len = 8
    batch = 2
    max_len = 10000

    key = jax.random.PRNGKey(0)
    x = jax.random.normal(key, (seq_len, batch, d_model), dtype=jnp.float32)

    # pe precomputed once in the activation dtype (no per-call cast traffic).
    pe = make_positional_encoding(d_model, max_len, dtype=x.dtype)

    out = positional_encoding_forward(x, pe)
    out = jax.block_until_ready(out)

    # Reference check (pure JAX), matching the PyTorch broadcast semantics.
    ref = x + pe[:seq_len, None, :].astype(x.dtype)
    assert out.shape == (seq_len, batch, d_model)
    assert jnp.allclose(out, ref, atol=1e-6), "mismatch vs reference"

    # Secondary check exercising the non-lane-aligned (jnp.tile fallback) path
    # and full-dim ragged blocks.
    k2 = jax.random.PRNGKey(1)
    x2 = jax.random.normal(k2, (200, 3, 64), dtype=jnp.float32)
    pe2 = make_positional_encoding(64, 512, dtype=x2.dtype)
    out2 = jax.block_until_ready(positional_encoding_forward(x2, pe2))
    ref2 = x2 + pe2[:200, None, :]
    assert jnp.allclose(out2, ref2, atol=1e-6), "mismatch vs reference (fallback path)"

    print("KERNEL_OK")
</pallas_src>

<mosaic_0001>
module attributes {stable_mosaic.version = 11 : i64} {
  func.func @_pe_add_kernel(%arg0: i32, %arg1: memref<8x256xf32, #tpu.memory_space<vmem>>, %arg2: memref<8x128xf32, #tpu.memory_space<vmem>>, %arg3: memref<8x256xf32, #tpu.memory_space<vmem>>) attributes {dimension_semantics = [#tpu.dimension_semantics<parallel>], iteration_bounds = array<i64: 1>, scalar_prefetch = 0 : i64, scratch_operands = 0 : i64, tpu.core_type = #tpu.core_type<tc>, window_params = [{transform_indices = @transform_0, window_bounds = array<i64: 8, 256>}, {transform_indices = @transform_1, window_bounds = array<i64: 8, 128>}, {transform_indices = @transform_2, window_bounds = array<i64: 8, 256>}]} {
    %c0 = arith.constant 0 : index
    %c0_0 = arith.constant 0 : index
    %0 = vector.load %arg2[%c0, %c0_0] : memref<8x128xf32, #tpu.memory_space<vmem>>, vector<8x128xf32>
    %c0_1 = arith.constant 0 : index
    %c0_2 = arith.constant 0 : index
    %1 = vector.load %arg1[%c0_1, %c0_2] : memref<8x256xf32, #tpu.memory_space<vmem>>, vector<8x128xf32>
    %2 = arith.addf %1, %0 : vector<8x128xf32>
    %c0_3 = arith.constant 0 : index
    %c0_4 = arith.constant 0 : index
    %3 = vector.load %arg3[%c0_3, %c0_4] : memref<8x256xf32, #tpu.memory_space<vmem>>, vector<8x128xf32>
    tpu.vector_store %arg3[%c0_3, %c0_4], %2 {strides = array<i32>} : memref<8x256xf32, #tpu.memory_space<vmem>>, vector<8x128xf32>,
    %c0_5 = arith.constant 0 : index
    %c128 = arith.constant 128 : index
    %4 = vector.load %arg1[%c0_5, %c128] : memref<8x256xf32, #tpu.memory_space<vmem>>, vector<8x128xf32>
    %5 = arith.addf %4, %0 : vector<8x128xf32>
    %c0_6 = arith.constant 0 : index
    %c128_7 = arith.constant 128 : index
    %6 = vector.load %arg3[%c0_6, %c128_7] : memref<8x256xf32, #tpu.memory_space<vmem>>, vector<8x128xf32>
    tpu.vector_store %arg3[%c0_6, %c128_7], %5 {strides = array<i32>} : memref<8x256xf32, #tpu.memory_space<vmem>>, vector<8x128xf32>,
    return
  }
  func.func @transform_0(%arg0: i32) -> (i32, i32) {
    %c0_i32 = arith.constant 0 : i32
    %c0_i32_0 = arith.constant 0 : i32
    return %arg0, %c0_i32 : i32, i32
  }
  func.func @transform_1(%arg0: i32) -> (i32, i32) {
    %c0_i32 = arith.constant 0 : i32
    %c0_i32_0 = arith.constant 0 : i32
    return %arg0, %c0_i32 : i32, i32
  }
  func.func @transform_2(%arg0: i32) -> (i32, i32) {
    %c0_i32 = arith.constant 0 : i32
    %c0_i32_0 = arith.constant 0 : i32
    return %arg0, %c0_i32 : i32, i32
  }
}

</mosaic_0001>

<llo_original>
// kernel: tpu_custom_call.1
$region0: #{tpu_custom_call.1}
  #allocation0 [shape = 'u32[]', space=smem, size = 0x4, offset = 0x4, fixed_abs, tag = 'smem constant byte address 0x4 - core index']
  #allocation1 [shape = 'u32[144,128]{1,0:T(1,128)}', space=vmem, size = 0x12000, scoped, tag = 'internal scratch']
  %s0 = inlined_call_operand.hbm [shape: f32[8,256], index: 0, kind: input, shape index: {}]
  %s1 = inlined_call_operand.hbm [shape: f32[8,128], index: 1, kind: input, shape index: {}]
  %s2 = inlined_call_operand.hbm [shape: f32[8,256], index: 2, kind: output, shape index: {}]
  %s3 = sld [smem:[#allocation0]]
  $region26: #{tpu_custom_call.1} parent=0
    _
  %s5 = ssub.s32 1, %s3
  %s6 = scalar_select 0, %s5, %s3
  $region1: #{tpu_custom_call.1} parent=0
    #allocation2 [shape = 'u8[8192]{0}', space=vmem, size = 0x2000, scoped, tag = 'input window, operand 0, single buffered']
    #allocation3 [shape = 's32[1]{0}', space=sflag, size = 0x4, scoped, tag = 'scoped memory for tpu_custom_call.1']
    #allocation4 [shape = 's32[1]{0}', space=sflag, size = 0x4, scoped, tag = 'scoped memory for tpu_custom_call.1']
    #allocation5 [shape = 'u8[4096]{0}', space=vmem, size = 0x1000, scoped, tag = 'input window, operand 1, single buffered']
    #allocation6 [shape = 's32[1]{0}', space=sflag, size = 0x4, scoped, tag = 'scoped memory for tpu_custom_call.1']
    #allocation7 [shape = 'u8[8192]{0}', space=vmem, size = 0x2000, scoped, tag = 'output window, operand 0, single buffered']
    %7 = vsyncpa [#allocation3], 0
    %8 = vsyncpa [#allocation6], 0
    %9 = vsyncpa [#allocation4], 0
    // Predicated region
    $region2: #{tpu_custom_call.1} parent=1 // pred_check
      _
    $region3: #{tpu_custom_call.1} parent=1 // pred_check_branch
      %11 = sbr.rel (0) target = $region5
    $region4: #{tpu_custom_call.1} parent=1 // pred_region
      %s13 = ssub.s32 256, 256
      %14 = vsyncadd [#allocation3], %s13
      %s16 = sshll.u32 [#allocation2], 4
      %s17 = int_to_ptr.vmem [resolvable:$true] %s16
      %19 = dma.hbm_to_vmem [thread:$0]  %s0, 256, %s17, [#allocation3]
    $region5: #{tpu_custom_call.1} parent=1 // pred_fallthru
      _
    // Predicated region
    $region6: #{tpu_custom_call.1} parent=1 // pred_check
      _
    $region7: #{tpu_custom_call.1} parent=1 // pred_check_branch
      %21 = sbr.rel (0) target = $region9
    $region8: #{tpu_custom_call.1} parent=1 // pred_region
      %s23 = ssub.s32 128, 128
      %24 = vsyncadd [#allocation6], %s23
      %s26 = sshll.u32 [#allocation5], 4
      %s27 = int_to_ptr.vmem [resolvable:$true] %s26
      %29 = dma.hbm_to_vmem [thread:$0]  %s1, 128, %s27, [#allocation6]
    $region9: #{tpu_custom_call.1} parent=1 // pred_fallthru
      _
    // Predicated region
    $region10: #{tpu_custom_call.1} parent=1 // pred_check
      _
    $region11: #{tpu_custom_call.1} parent=1 // pred_check_branch
      %31 = sbr.rel (0) target = $region13
    $region12: #{tpu_custom_call.1} parent=1 // pred_region
      %32 = dma.done [#allocation3], 256
    $region13: #{tpu_custom_call.1} parent=1 // pred_fallthru
      _
    // Predicated region
    $region14: #{tpu_custom_call.1} parent=1 // pred_check
      _
    $region15: #{tpu_custom_call.1} parent=1 // pred_check_branch
      %34 = sbr.rel (0) target = $region17
    $region16: #{tpu_custom_call.1} parent=1 // pred_region
      %35 = dma.done [#allocation6], 128
    $region17: #{tpu_custom_call.1} parent=1 // pred_fallthru
      _
    %v36 = vld [vmem:[#allocation5] sm:$0xff]
    %v37 = vld [vmem:[#allocation2] sm:$0xff]
    %v38 = vadd.f32 %v37, %v36
    %39 = vst [vmem:[#allocation7] sm:$0xff] %v38
    %v40 = vld [vmem:[#allocation2 + $0x8] sm:$0xff]
    %v41 = vadd.f32 %v40, %v36
    %42 = vst [vmem:[#allocation7 + $0x8] sm:$0xff] %v41
    // Predicated region
    $region18: #{tpu_custom_call.1} parent=1 // pred_check
      _
    $region19: #{tpu_custom_call.1} parent=1 // pred_check_branch
      %44 = sbr.rel (0) target = $region21
    $region20: #{tpu_custom_call.1} parent=1 // pred_region
      %s46 = ssub.s32 256, 256
      %47 = vsyncadd [#allocation4], %s46
      %s49 = sshll.u32 [#allocation7], 4
      %s50 = int_to_ptr.vmem [resolvable:$true] %s49
      %52 = dma.vmem_to_hbm [thread:$0]  %s50, 256, %s2, [#allocation4]
    $region21: #{tpu_custom_call.1} parent=1 // pred_fallthru
      _
    // Predicated region
    $region22: #{tpu_custom_call.1} parent=1 // pred_check
      _
    $region23: #{tpu_custom_call.1} parent=1 // pred_check_branch
      %54 = sbr.rel (0) target = $region25
    $region24: #{tpu_custom_call.1} parent=1 // pred_region
      %55 = dma.done [#allocation4], 256
    $region25: #{tpu_custom_call.1} parent=1 // pred_fallthru
      _
    %56 = vsyncpa [#allocation3], 1
    %57 = vsyncpa [#allocation6], 1
    %58 = vsyncpa [#allocation4], 1

</llo_original>
